<compile_context>
chip_gen: v7x
topology: tpu7x:2x2x1
jax: 0.10.0
libtpu: 0.0.40
codegen_flags: <defaults>
</compile_context>

<pallas_src>
import functools

import jax
import jax.numpy as jnp
from jax.experimental import pallas as pl
from jax.experimental.pallas import tpu as pltpu


def _round_up(x, m):
    return ((x + m - 1) // m) * m


def _outconv_kernel(w_ref, b_ref, x_ref, o_ref, *, c_in, c_out):
    """One (C_in, TL) -> (C_out, TL) tile of the 1x1 conv.

    w_ref: (C_out, C_in) f32 in SMEM (scalar reads)
    b_ref: (C_out,)      f32 in SMEM (scalar reads)
    x_ref: (C_in, TL)    VMEM tile, lane axis = spatial
    o_ref: (C_out, TL)   VMEM tile, lane axis = spatial
    """
    # Load each input-channel row once as a lane-dense (1, TL) slab.
    xs = [x_ref[ci:ci + 1, :].astype(jnp.float32) for ci in range(c_in)]
    for co in range(c_out):
        acc = xs[0] * w_ref[co, 0]
        for ci in range(1, c_in):
            acc = acc + xs[ci] * w_ref[co, ci]
        o_ref[co:co + 1, :] = (acc + b_ref[co]).astype(o_ref.dtype)


def outconv_forward(x_nchw, weight, bias, *, max_tl=16384, target_tile_bytes=1 << 20):
    """1x1 conv forward (PyTorch nn.Conv2d(in_ch, out_ch, 1) semantics).

    x_nchw : (N, C_in, H, W) float32
    weight : (C_out, C_in, 1, 1) float32
    bias   : (C_out,) float32
    returns: (N, C_out, H, W) float32
    """
    N, C_in, H, W = x_nchw.shape
    C_out = weight.shape[0]
    HW = H * W
    itemsize = jnp.dtype(x_nchw.dtype).itemsize

    # Spatial lane-tile: big (toward target_tile_bytes per buffer), multiple of 128.
    tl = max(128, (target_tile_bytes // (max(C_in, C_out) * itemsize)) // 128 * 128)
    tl = min(tl, max_tl)
    tl = min(tl, _round_up(HW, 128))
    hw_pad = _round_up(HW, tl)

    # NCHW-native: pure view reshape, no HBM transposes.
    x3 = x_nchw.reshape(N, C_in, HW)
    if hw_pad != HW:
        x3 = jnp.pad(x3, ((0, 0), (0, 0), (0, hw_pad - HW)))

    w2 = weight.reshape(C_out, C_in).astype(jnp.float32)
    b1 = bias.reshape(C_out).astype(jnp.float32)

    grid = (N, hw_pad // tl)

    # Double-buffered x + out tiles (+ headroom), clamped so it is safe on
    # v7x (64 MiB physical / 32 MiB default scoped) while explicit on all gens.
    vmem_need = 2 * (C_in + C_out) * tl * itemsize
    vmem_limit = int(min(max(4 * vmem_need, 4 << 20), 32 << 20))

    kernel = functools.partial(_outconv_kernel, c_in=C_in, c_out=C_out)

    out = pl.pallas_call(
        kernel,
        out_shape=jax.ShapeDtypeStruct((N, C_out, hw_pad), x_nchw.dtype),
        grid=grid,
        in_specs=[
            pl.BlockSpec(memory_space=pltpu.MemorySpace.SMEM),      # weight (C_out, C_in)
            pl.BlockSpec(memory_space=pltpu.MemorySpace.SMEM),      # bias   (C_out,)
            pl.BlockSpec((None, C_in, tl), lambda n, t: (n, 0, t)),  # x tile
        ],
        out_specs=pl.BlockSpec((None, C_out, tl), lambda n, t: (n, 0, t)),
        compiler_params=pltpu.CompilerParams(
            dimension_semantics=("parallel", "parallel"),
            vmem_limit_bytes=vmem_limit,
        ),
    )(w2, b1, x3)

    if hw_pad != HW:
        out = out[:, :, :HW]
    return out.reshape(N, C_out, H, W)


if __name__ == "__main__":
    key = jax.random.PRNGKey(0)
    k_x, k_w, k_b, k_x2 = jax.random.split(key, 4)

    N, C_in, H, W = 2, 4, 16, 16
    C_out = 3

    x = jax.random.normal(k_x, (N, C_in, H, W), dtype=jnp.float32)
    # Deterministic synthetic params (shapes match nn.Conv2d(in_ch, out_ch, 1)).
    weight = jax.random.normal(k_w, (C_out, C_in, 1, 1), dtype=jnp.float32) * 0.1
    bias = jax.random.normal(k_b, (C_out,), dtype=jnp.float32) * 0.1

    y = jax.block_until_ready(outconv_forward(x, weight, bias))
    ref = jnp.einsum("nchw,oc->nohw", x, weight.reshape(C_out, C_in),
                     precision=jax.lax.Precision.HIGHEST) \
        + bias.reshape(1, C_out, 1, 1)
    assert y.shape == (N, C_out, H, W)
    assert jnp.allclose(y, ref, atol=1e-5, rtol=1e-5)

    # Non-128-multiple spatial size exercises the padded-tail path.
    H2, W2 = 7, 9
    x2 = jax.random.normal(k_x2, (N, C_in, H2, W2), dtype=jnp.float32)
    y2 = jax.block_until_ready(outconv_forward(x2, weight, bias))
    ref2 = jnp.einsum("nchw,oc->nohw", x2, weight.reshape(C_out, C_in),
                      precision=jax.lax.Precision.HIGHEST) \
        + bias.reshape(1, C_out, 1, 1)
    assert y2.shape == (N, C_out, H2, W2)
    assert jnp.allclose(y2, ref2, atol=1e-5, rtol=1e-5)

    print("KERNEL_OK")
</pallas_src>

<mosaic_0001>
module attributes {stable_mosaic.version = 11 : i64} {
  func.func @_outconv_kernel(%arg0: i32, %arg1: i32, %arg2: memref<3x4xf32, #tpu.memory_space<smem>>, %arg3: memref<3xf32, #tpu.memory_space<smem>>, %arg4: memref<1x4x256xf32, #tpu.memory_space<vmem>>, %arg5: memref<1x3x256xf32, #tpu.memory_space<vmem>>) attributes {dimension_semantics = [#tpu.dimension_semantics<parallel>, #tpu.dimension_semantics<parallel>], iteration_bounds = array<i64: 2, 1>, scalar_prefetch = 0 : i64, scratch_operands = 0 : i64, tpu.core_type = #tpu.core_type<tc>, window_params = [{transform_indices = @transform_0, window_bounds = array<i64: 3, 4>}, {transform_indices = @transform_1, window_bounds = array<i64: 3>}, {transform_indices = @transform_2, window_bounds = array<i64: 1, 4, 256>}, {transform_indices = @transform_3, window_bounds = array<i64: 1, 3, 256>}]} {
    %c0 = arith.constant 0 : index
    %c0_0 = arith.constant 0 : index
    %c0_1 = arith.constant 0 : index
    %0 = vector.load %arg4[%c0, %c0_0, %c0_1] : memref<1x4x256xf32, #tpu.memory_space<vmem>>, vector<1x1x256xf32>
    %1 = vector.shape_cast %0 : vector<1x1x256xf32> to vector<1x256xf32>
    %c0_2 = arith.constant 0 : index
    %c1 = arith.constant 1 : index
    %c0_3 = arith.constant 0 : index
    %2 = vector.load %arg4[%c0_2, %c1, %c0_3] : memref<1x4x256xf32, #tpu.memory_space<vmem>>, vector<1x1x256xf32>
    %3 = vector.shape_cast %2 : vector<1x1x256xf32> to vector<1x256xf32>
    %c0_4 = arith.constant 0 : index
    %c2 = arith.constant 2 : index
    %c0_5 = arith.constant 0 : index
    %4 = vector.load %arg4[%c0_4, %c2, %c0_5] : memref<1x4x256xf32, #tpu.memory_space<vmem>>, vector<1x1x256xf32>
    %5 = vector.shape_cast %4 : vector<1x1x256xf32> to vector<1x256xf32>
    %c0_6 = arith.constant 0 : index
    %c3 = arith.constant 3 : index
    %c0_7 = arith.constant 0 : index
    %6 = vector.load %arg4[%c0_6, %c3, %c0_7] : memref<1x4x256xf32, #tpu.memory_space<vmem>>, vector<1x1x256xf32>
    %7 = vector.shape_cast %6 : vector<1x1x256xf32> to vector<1x256xf32>
    %c0_8 = arith.constant 0 : index
    %c0_9 = arith.constant 0 : index
    %8 = memref.load %arg2[%c0_8, %c0_9] : memref<3x4xf32, #tpu.memory_space<smem>>
    %9 = vector.broadcast %8 : f32 to vector<1x256xf32>
    %10 = arith.mulf %1, %9 : vector<1x256xf32>
    %c0_10 = arith.constant 0 : index
    %c1_11 = arith.constant 1 : index
    %11 = memref.load %arg2[%c0_10, %c1_11] : memref<3x4xf32, #tpu.memory_space<smem>>
    %12 = vector.broadcast %11 : f32 to vector<1x256xf32>
    %13 = arith.mulf %3, %12 : vector<1x256xf32>
    %14 = arith.addf %10, %13 : vector<1x256xf32>
    %c0_12 = arith.constant 0 : index
    %c2_13 = arith.constant 2 : index
    %15 = memref.load %arg2[%c0_12, %c2_13] : memref<3x4xf32, #tpu.memory_space<smem>>
    %16 = vector.broadcast %15 : f32 to vector<1x256xf32>
    %17 = arith.mulf %5, %16 : vector<1x256xf32>
    %18 = arith.addf %14, %17 : vector<1x256xf32>
    %c0_14 = arith.constant 0 : index
    %c3_15 = arith.constant 3 : index
    %19 = memref.load %arg2[%c0_14, %c3_15] : memref<3x4xf32, #tpu.memory_space<smem>>
    %20 = vector.broadcast %19 : f32 to vector<1x256xf32>
    %21 = arith.mulf %7, %20 : vector<1x256xf32>
    %22 = arith.addf %18, %21 : vector<1x256xf32>
    %c0_16 = arith.constant 0 : index
    %23 = memref.load %arg3[%c0_16] : memref<3xf32, #tpu.memory_space<smem>>
    %24 = vector.broadcast %23 : f32 to vector<1x256xf32>
    %25 = arith.addf %22, %24 : vector<1x256xf32>
    %c0_17 = arith.constant 0 : index
    %c0_18 = arith.constant 0 : index
    %c0_19 = arith.constant 0 : index
    %26 = vector.load %arg5[%c0_17, %c0_18, %c0_19] : memref<1x3x256xf32, #tpu.memory_space<vmem>>, vector<1x1x256xf32>
    %27 = vector.shape_cast %26 : vector<1x1x256xf32> to vector<1x256xf32>
    %28 = vector.shape_cast %25 : vector<1x256xf32> to vector<1x1x256xf32>
    tpu.vector_store %arg5[%c0_17, %c0_18, %c0_19], %28 {strides = array<i32>} : memref<1x3x256xf32, #tpu.memory_space<vmem>>, vector<1x1x256xf32>,
    %c1_20 = arith.constant 1 : index
    %c0_21 = arith.constant 0 : index
    %29 = memref.load %arg2[%c1_20, %c0_21] : memref<3x4xf32, #tpu.memory_space<smem>>
    %30 = vector.broadcast %29 : f32 to vector<1x256xf32>
    %31 = arith.mulf %1, %30 : vector<1x256xf32>
    %c1_22 = arith.constant 1 : index
    %c1_23 = arith.constant 1 : index
    %32 = memref.load %arg2[%c1_22, %c1_23] : memref<3x4xf32, #tpu.memory_space<smem>>
    %33 = vector.broadcast %32 : f32 to vector<1x256xf32>
    %34 = arith.mulf %3, %33 : vector<1x256xf32>
    %35 = arith.addf %31, %34 : vector<1x256xf32>
    %c1_24 = arith.constant 1 : index
    %c2_25 = arith.constant 2 : index
    %36 = memref.load %arg2[%c1_24, %c2_25] : memref<3x4xf32, #tpu.memory_space<smem>>
    %37 = vector.broadcast %36 : f32 to vector<1x256xf32>
    %38 = arith.mulf %5, %37 : vector<1x256xf32>
    %39 = arith.addf %35, %38 : vector<1x256xf32>
    %c1_26 = arith.constant 1 : index
    %c3_27 = arith.constant 3 : index
    %40 = memref.load %arg2[%c1_26, %c3_27] : memref<3x4xf32, #tpu.memory_space<smem>>
    %41 = vector.broadcast %40 : f32 to vector<1x256xf32>
    %42 = arith.mulf %7, %41 : vector<1x256xf32>
    %43 = arith.addf %39, %42 : vector<1x256xf32>
    %c1_28 = arith.constant 1 : index
    %44 = memref.load %arg3[%c1_28] : memref<3xf32, #tpu.memory_space<smem>>
    %45 = vector.broadcast %44 : f32 to vector<1x256xf32>
    %46 = arith.addf %43, %45 : vector<1x256xf32>
    %c0_29 = arith.constant 0 : index
    %c1_30 = arith.constant 1 : index
    %c0_31 = arith.constant 0 : index
    %47 = vector.load %arg5[%c0_29, %c1_30, %c0_31] : memref<1x3x256xf32, #tpu.memory_space<vmem>>, vector<1x1x256xf32>
    %48 = vector.shape_cast %47 : vector<1x1x256xf32> to vector<1x256xf32>
    %49 = vector.shape_cast %46 : vector<1x256xf32> to vector<1x1x256xf32>
    tpu.vector_store %arg5[%c0_29, %c1_30, %c0_31], %49 {strides = array<i32>} : memref<1x3x256xf32, #tpu.memory_space<vmem>>, vector<1x1x256xf32>,
    %c2_32 = arith.constant 2 : index
    %c0_33 = arith.constant 0 : index
    %50 = memref.load %arg2[%c2_32, %c0_33] : memref<3x4xf32, #tpu.memory_space<smem>>
    %51 = vector.broadcast %50 : f32 to vector<1x256xf32>
    %52 = arith.mulf %1, %51 : vector<1x256xf32>
    %c2_34 = arith.constant 2 : index
    %c1_35 = arith.constant 1 : index
    %53 = memref.load %arg2[%c2_34, %c1_35] : memref<3x4xf32, #tpu.memory_space<smem>>
    %54 = vector.broadcast %53 : f32 to vector<1x256xf32>
    %55 = arith.mulf %3, %54 : vector<1x256xf32>
    %56 = arith.addf %52, %55 : vector<1x256xf32>
    %c2_36 = arith.constant 2 : index
    %c2_37 = arith.constant 2 : index
    %57 = memref.load %arg2[%c2_36, %c2_37] : memref<3x4xf32, #tpu.memory_space<smem>>
    %58 = vector.broadcast %57 : f32 to vector<1x256xf32>
    %59 = arith.mulf %5, %58 : vector<1x256xf32>
    %60 = arith.addf %56, %59 : vector<1x256xf32>
    %c2_38 = arith.constant 2 : index
    %c3_39 = arith.constant 3 : index
    %61 = memref.load %arg2[%c2_38, %c3_39] : memref<3x4xf32, #tpu.memory_space<smem>>
    %62 = vector.broadcast %61 : f32 to vector<1x256xf32>
    %63 = arith.mulf %7, %62 : vector<1x256xf32>
    %64 = arith.addf %60, %63 : vector<1x256xf32>
    %c2_40 = arith.constant 2 : index
    %65 = memref.load %arg3[%c2_40] : memref<3xf32, #tpu.memory_space<smem>>
    %66 = vector.broadcast %65 : f32 to vector<1x256xf32>
    %67 = arith.addf %64, %66 : vector<1x256xf32>
    %c0_41 = arith.constant 0 : index
    %c2_42 = arith.constant 2 : index
    %c0_43 = arith.constant 0 : index
    %68 = vector.load %arg5[%c0_41, %c2_42, %c0_43] : memref<1x3x256xf32, #tpu.memory_space<vmem>>, vector<1x1x256xf32>
    %69 = vector.shape_cast %68 : vector<1x1x256xf32> to vector<1x256xf32>
    %70 = vector.shape_cast %67 : vector<1x256xf32> to vector<1x1x256xf32>
    tpu.vector_store %arg5[%c0_41, %c2_42, %c0_43], %70 {strides = array<i32>} : memref<1x3x256xf32, #tpu.memory_space<vmem>>, vector<1x1x256xf32>,
    return
  }
  func.func @transform_0(%arg0: i32, %arg1: i32) -> (i32, i32) {
    %c0_i32 = arith.constant 0 : i32
    %c0_i32_0 = arith.constant 0 : i32
    %c0_i32_1 = arith.constant 0 : i32
    return %c0_i32, %c0_i32_0 : i32, i32
  }
  func.func @transform_1(%arg0: i32, %arg1: i32) -> i32 {
    %c0_i32 = arith.constant 0 : i32
    %c0_i32_0 = arith.constant 0 : i32
    return %c0_i32 : i32
  }
  func.func @transform_2(%arg0: i32, %arg1: i32) -> (i32, i32, i32) {
    %c0_i32 = arith.constant 0 : i32
    %c0_i32_0 = arith.constant 0 : i32
    return %arg0, %c0_i32, %arg1 : i32, i32, i32
  }
  func.func @transform_3(%arg0: i32, %arg1: i32) -> (i32, i32, i32) {
    %c0_i32 = arith.constant 0 : i32
    %c0_i32_0 = arith.constant 0 : i32
    return %arg0, %c0_i32, %arg1 : i32, i32, i32
  }
}

</mosaic_0001>

<llo_original>
// kernel: tpu_custom_call.1
$region0: #{tpu_custom_call.1}
  #allocation0 [shape = 'u32[]', space=smem, size = 0x4, offset = 0x4, fixed_abs, tag = 'smem constant byte address 0x4 - core index']
  #allocation1 [shape = 'u32[144,128]{1,0:T(1,128)}', space=vmem, size = 0x12000, scoped, tag = 'internal scratch']
  %s0 = inlined_call_operand.hbm [shape: f32[3,4], index: 0, kind: input, shape index: {}]
  %s1 = inlined_call_operand.vmem [shape: f32[3], index: 1, kind: input, shape index: {}]
  %s2 = inlined_call_operand.hbm [shape: f32[2,4,256], index: 2, kind: input, shape index: {}]
  %s3 = inlined_call_operand.vmem [shape: f32[2,3,256], index: 3, kind: output, shape index: {}]
  %s4 = sld [smem:[#allocation0]]
  $region57: #{tpu_custom_call.1} parent=0
    _
  %s6 = ssub.s32 1, %s4
  %s7 = scalar_select 0, %s6, %s4
  $region1: #{tpu_custom_call.1} parent=0
    #allocation2 [shape = 'u8[2048]{0}', space=smem, size = 0x800, scoped, tag = 'input window, operand 0, single buffered']
    #allocation3 [shape = 's32[2]{0}', space=sflag, size = 0x8, scoped, tag = 'scoped memory for tpu_custom_call.1']
    #allocation4 [shape = 's32[2]{0}', space=sflag, size = 0x8, scoped, tag = 'scoped memory for tpu_custom_call.1']
    #allocation5 [shape = 's32[2]{0}', space=sflag, size = 0x8, scoped, tag = 'scoped memory for tpu_custom_call.1']
    #allocation6 [shape = 'u8[512]{0}', space=smem, size = 0x200, scoped, tag = 'input window, operand 1, single buffered']
    #allocation7 [shape = 'u8[8192]{0}', space=vmem, size = 0x2000, scoped, tag = 'input window, operand 2']
    %8 = vsyncpa [#allocation4], 0
    %9 = vsyncpa [#allocation5], 0
    %10 = vsyncpa [#allocation3], 0
    %s11 = scalar_lea.sflag [#allocation3], 1
    %12 = vsyncpa %s11, 0
    loop: start=0, step=1, limit=4
    $region2: #{tpu_custom_call.1} parent=1 // loop_pre_header
      _
    $region3: #{tpu_custom_call.1} parent=1 // loop_header
      %s14 = sphi 0, %s18
      %p15 = scmp.ge.s32.totalorder %s14, 4
      %s21 = sphi 0, %s33
      %s22 = sphi 0, %s29
      %s23 = sphi 0, %s21
      %s24 = sphi 0, %s22
      %s25 = sphi 0, %s23
      %s26 = sphi 0, %s24
      %s34 = sphi 0, %s34
      %s36 = sphi 0, %s34
      %s37 = sphi 0, %s36
      %s51 = sphi 0, %s37
      %s55 = sphi 0, %s55
      %s57 = sphi 0, %s55
      %s58 = sphi 0, %s57
      %s72 = sphi 0, %s58
      %s80 = sphi 0, %s82
      %s83 = sphi 0, %s80
      %s84 = sphi 0, %s83
      %s100 = sphi 0, %s84
      %s108 = sphi 0, %s110
      %s111 = sphi 0, %s108
      %s112 = sphi 0, %s111
      %s128 = sphi 0, %s112
    $region4: #{tpu_custom_call.1} parent=1 // loop_header_branch
      %17 = sbr.rel (%p15) target = $region8
    $region5: #{tpu_custom_call.1} parent=1 // loop_body
      %s19 = ssub.s32 %s14, 1
      %s20 = ssub.s32 %s14, 2
      %s27 = sadd.s32 1, %s22
      %p28 = scmp.ge.s32.totalorder %s27, 1
      %s29 = scalar_select %p28, 0, %s27
      %s30 = sadd.s32 1, %s21
      %s31 = scalar_select %p28, %s30, %s21
      %p32 = scmp.ge.s32.totalorder %s31, 2
      %s33 = scalar_select %p32, 0, %s31
      %s35 = sadd.s32 %s34, 1
      %p38 = scmp.eq.s32.totalorder %s14, 1
      %p39 = scmp.ne.s32.totalorder %s34, %s36
      %p40 = scmp.eq.s32.totalorder %s14, 0
      %p41 = por %p39, %p40
      %p42 = scmp.ne.s32.totalorder %s34, %s36
      %p43 = scmp.eq.s32.totalorder %s19, 1
      %p44 = por %p42, %p43
      %p45 = scmp.ne.s32.totalorder %s36, %s37
      %p46 = scmp.eq.s32.totalorder %s19, 0
      %p47 = por %p45, %p46
      %p48 = scmp.ne.s32.totalorder %s36, %s37
      %p49 = scmp.eq.s32.totalorder %s20, 1
      %p50 = por %p48, %p49
      %p52 = scmp.ne.s32.totalorder %s37, %s51
      %p53 = scmp.eq.s32.totalorder %s20, 0
      %p54 = por %p52, %p53
      %s56 = sadd.s32 %s55, 1
      %p59 = scmp.eq.s32.totalorder %s14, 1
      %p60 = scmp.ne.s32.totalorder %s55, %s57
      %p61 = scmp.eq.s32.totalorder %s14, 0
      %p62 = por %p60, %p61
      %p63 = scmp.ne.s32.totalorder %s55, %s57
      %p64 = scmp.eq.s32.totalorder %s19, 1
      %p65 = por %p63, %p64
      %p66 = scmp.ne.s32.totalorder %s57, %s58
      %p67 = scmp.eq.s32.totalorder %s19, 0
      %p68 = por %p66, %p67
      %p69 = scmp.ne.s32.totalorder %s57, %s58
      %p70 = scmp.eq.s32.totalorder %s20, 1
      %p71 = por %p69, %p70
      %p73 = scmp.ne.s32.totalorder %s58, %s72
      %p74 = scmp.eq.s32.totalorder %s20, 0
      %p75 = por %p73, %p74
      %s76 = ssub.s32 %s21, %s33
      %s77 = ssub.s32 %s22, %s29
      %s78 = sor.u32 %s76, %s77
      %p79 = scmp.eq.s32.totalorder %s78, 0
      %s81 = sadd.s32 %s80, 1
      %s82 = scalar_select %p79, %s80, %s81
      %p85 = pneg %p79
      %p86 = scmp.eq.s32.totalorder %s14, 1
      %p87 = por %p85, %p86
      %p88 = scmp.ne.s32.totalorder %s80, %s83
      %p89 = scmp.eq.s32.totalorder %s14, 0
      %p90 = por %p88, %p89
      %p91 = scmp.ne.s32.totalorder %s80, %s83
      %p92 = scmp.eq.s32.totalorder %s19, 1
      %p93 = por %p91, %p92
      %p94 = scmp.ne.s32.totalorder %s83, %s84
      %p95 = scmp.eq.s32.totalorder %s19, 0
      %p96 = por %p94, %p95
      %p97 = scmp.ne.s32.totalorder %s83, %s84
      %p98 = scmp.eq.s32.totalorder %s20, 1
      %p99 = por %p97, %p98
      %p101 = scmp.ne.s32.totalorder %s84, %s100
      %p102 = scmp.eq.s32.totalorder %s20, 0
      %p103 = por %p101, %p102
      %s104 = ssub.s32 %s21, %s33
      %s105 = ssub.s32 %s22, %s29
      %s106 = sor.u32 %s104, %s105
      %p107 = scmp.eq.s32.totalorder %s106, 0
      %s109 = sadd.s32 %s108, 1
      %s110 = scalar_select %p107, %s108, %s109
      %p113 = pneg %p107
      %p114 = scmp.eq.s32.totalorder %s14, 1
      %p115 = por %p113, %p114
      %p116 = scmp.ne.s32.totalorder %s108, %s111
      %p117 = scmp.eq.s32.totalorder %s14, 0
      %p118 = por %p116, %p117
      %p119 = scmp.ne.s32.totalorder %s108, %s111
      %p120 = scmp.eq.s32.totalorder %s19, 1
      %p121 = por %p119, %p120
      %p122 = scmp.ne.s32.totalorder %s111, %s112
      %p123 = scmp.eq.s32.totalorder %s19, 0
      %p124 = por %p122, %p123
      %p125 = scmp.ne.s32.totalorder %s111, %s112
      %p126 = scmp.eq.s32.totalorder %s20, 1
      %p127 = por %p125, %p126
      %p129 = scmp.ne.s32.totalorder %s112, %s128
      %p130 = scmp.eq.s32.totalorder %s20, 0
      %p131 = por %p129, %p130
      %p132 = scmp.le.s32.totalorder 1, %s14
      %p133 = scmp.lt.s32.totalorder %s14, 3
      %p134 = pnand %p132, %p133
      %p135 = pneg %p134
      // Predicated region
      $region9: #{tpu_custom_call.1} parent=5 // pred_check
        _
      $region10: #{tpu_custom_call.1} parent=5 // pred_check_branch
        %137 = sbr.rel (%p134) target = $region12
      $region11: #{tpu_custom_call.1} parent=5 // pred_region
        %s138 = ssub.s32 %s14, 1
        // Predicated region
        $region13: #{tpu_custom_call.1} parent=11 // pred_check
          %p139 = pneg %p47
        $region14: #{tpu_custom_call.1} parent=11 // pred_check_branch
          %141 = sbr.rel (%p139) target = $region16
        $region15: #{tpu_custom_call.1} parent=11 // pred_region
          %s143 = ssub.s32 64, 64
          %144 = vsyncadd [#allocation4], %s143
          %147 = dma.hbm_to_smem %s0, 64, [#allocation2], [#allocation4]
        $region16: #{tpu_custom_call.1} parent=11 // pred_fallthru
          _
        // Predicated region
        $region17: #{tpu_custom_call.1} parent=11 // pred_check
          %p148 = pneg %p68
        $region18: #{tpu_custom_call.1} parent=11 // pred_check_branch
          %150 = sbr.rel (%p148) target = $region20
        $region19: #{tpu_custom_call.1} parent=11 // pred_region
          %s152 = ssub.s32 16, 16
          %153 = vsyncadd [#allocation5], %s152
          %s155 = sshll.u32 %s1, 4
          %s156 = int_to_ptr.vmem [resolvable:$true] %s155
          %158 = dma.vmem_to_smem %s156, 16, [#allocation6], [#allocation5]
        $region20: #{tpu_custom_call.1} parent=11 // pred_fallthru
          _
      $region12: #{tpu_custom_call.1} parent=5 // pred_fallthru
        _
      %p159 = scmp.lt.s32.totalorder %s14, 2
      // Predicated region
      $region21: #{tpu_custom_call.1} parent=5 // pred_check
        %p160 = pneg %p159
      $region22: #{tpu_custom_call.1} parent=5 // pred_check_branch
        %162 = sbr.rel (%p160) target = $region24
      $region23: #{tpu_custom_call.1} parent=5 // pred_region
        // Predicated region
        $region25: #{tpu_custom_call.1} parent=23 // pred_check
          %p163 = pneg %p90
        $region26: #{tpu_custom_call.1} parent=23 // pred_check_branch
          %165 = sbr.rel (%p163) target = $region28
        $region27: #{tpu_custom_call.1} parent=23 // pred_region
          %s166 = sand.u32 %s80, 1
          %s167 = scalar_lea.sflag [#allocation3], %s166
          %s168 = sand.u32 %s80, 1
          %s169 = smul.addr %s168, 8
          %s170 = scalar_lea.vmem [#allocation7], %s169
          %s171 = smul.u32 2, %s22
          %s173 = ssub.s32 128, 128
          %174 = vsyncadd %s167, %s173
          %s175 = smul.addr %s21, 2
          %s176 = sadd.s32 %s171, %s175
          %s177 = smul.addr %s176, 64
          %s178 = scalar_lea.hbm %s2, %s177
          %s180 = sshll.u32 %s170, 4
          %s181 = int_to_ptr.vmem [resolvable:$true] %s180
          %183 = dma.hbm_to_vmem [thread:$0]  %s178, 128, %s181, %s167
        $region28: #{tpu_custom_call.1} parent=23 // pred_fallthru
          _
      $region24: #{tpu_custom_call.1} parent=5 // pred_fallthru
        _
      %p184 = scmp.le.s32.totalorder 1, %s14
      %p185 = scmp.lt.s32.totalorder %s14, 3
      %p186 = pnand %p184, %p185
      %p187 = pneg %p186
      // Predicated region
      $region29: #{tpu_custom_call.1} parent=5 // pred_check
        _
      $region30: #{tpu_custom_call.1} parent=5 // pred_check_branch
        %189 = sbr.rel (%p186) target = $region32
      $region31: #{tpu_custom_call.1} parent=5 // pred_region
        %s190 = ssub.s32 %s14, 1
        // Predicated region
        $region33: #{tpu_custom_call.1} parent=31 // pred_check
          %p191 = pneg %p47
        $region34: #{tpu_custom_call.1} parent=31 // pred_check_branch
          %193 = sbr.rel (%p191) target = $region36
        $region35: #{tpu_custom_call.1} parent=31 // pred_region
          %194 = dma.done [#allocation4], 64
        $region36: #{tpu_custom_call.1} parent=31 // pred_fallthru
          _
        // Predicated region
        $region37: #{tpu_custom_call.1} parent=31 // pred_check
          %p195 = pneg %p68
        $region38: #{tpu_custom_call.1} parent=31 // pred_check_branch
          %197 = sbr.rel (%p195) target = $region40
        $region39: #{tpu_custom_call.1} parent=31 // pred_region
          %198 = dma.done [#allocation5], 16
        $region40: #{tpu_custom_call.1} parent=31 // pred_fallthru
          _
        %s199 = sand.u32 %s83, 1
        %s200 = scalar_lea.sflag [#allocation3], %s199
        %s201 = sand.u32 %s83, 1
        %s202 = smul.addr %s201, 8
        %s203 = scalar_lea.vmem [#allocation7], %s202
        // Predicated region
        $region41: #{tpu_custom_call.1} parent=31 // pred_check
          %p204 = pneg %p96
        $region42: #{tpu_custom_call.1} parent=31 // pred_check_branch
          %206 = sbr.rel (%p204) target = $region44
        $region43: #{tpu_custom_call.1} parent=31 // pred_region
          %207 = dma.done %s200, 128
        $region44: #{tpu_custom_call.1} parent=31 // pred_fallthru
          _
        %208 = sfence
        %p209 = pneg %p47
        %p210 = pneg %p44
        %p211 = pneg %p68
        %p212 = pneg %p65
        %s213 = sand.u32 %s83, 1
        %s214 = scalar_lea.sflag [#allocation3], %s213
        %s215 = sand.u32 %s83, 1
        %s216 = smul.addr %s215, 8
        %s217 = scalar_lea.vmem [#allocation7], %s216
        %p218 = pneg %p96
        %p219 = pneg %p93
        %p220 = pneg %p124
        %p221 = pneg %p121
        %s222 = smul.u32 2, %s24
        %p223 = scmp.lt.s32.totalorder %s23, 1
        %s224 = scalar_select %p223, %s23, 1
        %p225 = scmp.lt.s32.totalorder %s222, 1
        %s226 = scalar_select %p225, %s222, 1
        %s227 = smul.addr %s224, 2
        %s228 = sadd.s32 %s226, %s227
        %s229 = smul.addr %s228, 4
        %s230 = scalar_lea.vmem %s3, %s229
        %s231 = smul.u32 2, %s24
        %s232 = smul.u32 2, %s24
        %p233 = scmp.lt.s32.totalorder %s23, 1
        %s234 = scalar_select %p233, %s23, 1
        %p235 = scmp.lt.s32.totalorder %s232, 1
        %s236 = scalar_select %p235, %s232, 1
        %s237 = smul.addr %s234, 2
        %s238 = sadd.s32 %s236, %s237
        %s239 = smul.addr %s238, 4
        %s240 = scalar_lea.vmem %s3, %s239
        %s241 = smul.u32 2, %s24
        %v242 = vld [vmem:[%s203] ss:$4 sm:$0x3]
        %s243 = scalar_lea.vmem %s203, 1 [#allocation7]
        %v244 = vld [vmem:[%s243] ss:$4 sm:$0x3]
        %s245 = scalar_lea.vmem %s203, 2 [#allocation7]
        %v246 = vld [vmem:[%s245] ss:$4 sm:$0x3]
        %s247 = scalar_lea.vmem %s203, 3 [#allocation7]
        %v248 = vld [vmem:[%s247] ss:$4 sm:$0x3]
        %s249 = sld [smem:[#allocation2]]
        %v250 = vstv %s249
        %v251 = vmul.f32 %v242, %v250
        %s252 = sld [smem:[#allocation2 + $0x1]]
        %v253 = vstv %s252
        %v254 = vmul.f32 %v244, %v253
        %v255 = vadd.f32 %v251, %v254
        %s256 = sld [smem:[#allocation2 + $0x2]]
        %v257 = vstv %s256
        %v258 = vmul.f32 %v246, %v257
        %v259 = vadd.f32 %v255, %v258
        %s260 = sld [smem:[#allocation2 + $0x3]]
        %v261 = vstv %s260
        %v262 = vmul.f32 %v248, %v261
        %v263 = vadd.f32 %v259, %v262
        %s264 = sld [smem:[#allocation6]]
        %v265 = vstv %s264
        %v266 = vadd.f32 %v263, %v265
        %v267 = vlaneseq
        %vm268 = vcmp.ge.s32.totalorder %v267, 0
        %vm269 = vcmp.lt.s32.totalorder %v267, 256
        %vm270 = vmand %vm268, %vm269
        %271 = vst.msk [vmem:[%s240] ss:$4 sm:$0x3] %vm270, %v266
        %s272 = sld [smem:[#allocation2 + $0x80]]
        %v273 = vstv %s272
        %v274 = vmul.f32 %v242, %v273
        %s275 = sld [smem:[#allocation2 + $0x81]]
        %v276 = vstv %s275
        %v277 = vmul.f32 %v244, %v276
        %v278 = vadd.f32 %v274, %v277
        %s279 = sld [smem:[#allocation2 + $0x82]]
        %v280 = vstv %s279
        %v281 = vmul.f32 %v246, %v280
        %v282 = vadd.f32 %v278, %v281
        %s283 = sld [smem:[#allocation2 + $0x83]]
        %v284 = vstv %s283
        %v285 = vmul.f32 %v248, %v284
        %v286 = vadd.f32 %v282, %v285
        %s287 = sld [smem:[#allocation6 + $0x1]]
        %v288 = vstv %s287
        %v289 = vadd.f32 %v286, %v288
        %s290 = scalar_lea.vmem %s240, 1
        %291 = vst.msk [vmem:[%s290] ss:$4 sm:$0x3] %vm270, %v289
        %s292 = sld [smem:[#allocation2 + $0x100]]
        %v293 = vstv %s292
        %v294 = vmul.f32 %v242, %v293
        %s295 = sld [smem:[#allocation2 + $0x101]]
        %v296 = vstv %s295
        %v297 = vmul.f32 %v244, %v296
        %v298 = vadd.f32 %v294, %v297
        %s299 = sld [smem:[#allocation2 + $0x102]]
        %v300 = vstv %s299
        %v301 = vmul.f32 %v246, %v300
        %v302 = vadd.f32 %v298, %v301
        %s303 = sld [smem:[#allocation2 + $0x103]]
        %v304 = vstv %s303
        %v305 = vmul.f32 %v248, %v304
        %v306 = vadd.f32 %v302, %v305
        %s307 = sld [smem:[#allocation6 + $0x2]]
        %v308 = vstv %s307
        %v309 = vadd.f32 %v306, %v308
        %s310 = scalar_lea.vmem %s240, 2
        %311 = vst.msk [vmem:[%s310] ss:$4 sm:$0x3] %vm270, %v309
        %s312 = smul.u32 2, %s24
        %p313 = scmp.lt.s32.totalorder %s23, 1
        %s314 = scalar_select %p313, %s23, 1
        %p315 = scmp.lt.s32.totalorder %s312, 1
        %s316 = scalar_select %p315, %s312, 1
        %s317 = smul.addr %s314, 2
        %s318 = sadd.s32 %s316, %s317
        %s319 = smul.addr %s318, 4
        %s320 = scalar_lea.vmem %s3, %s319
        // Predicated region
        $region45: #{tpu_custom_call.1} parent=31 // pred_check
          %p321 = pneg %p121
        $region46: #{tpu_custom_call.1} parent=31 // pred_check_branch
          %323 = sbr.rel (%p321) target = $region48
        $region47: #{tpu_custom_call.1} parent=31 // pred_region
          %s324 = smul.u32 2, %s24
        $region48: #{tpu_custom_call.1} parent=31 // pred_fallthru
          _
      $region32: #{tpu_custom_call.1} parent=5 // pred_fallthru
        _
      %p325 = scmp.le.s32.totalorder 2, %s14
      // Predicated region
      $region49: #{tpu_custom_call.1} parent=5 // pred_check
        %p326 = pneg %p325
      $region50: #{tpu_custom_call.1} parent=5 // pred_check_branch
        %328 = sbr.rel (%p326) target = $region52
      $region51: #{tpu_custom_call.1} parent=5 // pred_region
        %s329 = ssub.s32 %s14, 2
        // Predicated region
        $region53: #{tpu_custom_call.1} parent=51 // pred_check
          %p330 = pneg %p127
        $region54: #{tpu_custom_call.1} parent=51 // pred_check_branch
          %332 = sbr.rel (%p330) target = $region56
        $region55: #{tpu_custom_call.1} parent=51 // pred_region
          %s333 = smul.u32 2, %s26
          %p334 = scmp.lt.s32.totalorder %s25, 1
          %s335 = scalar_select %p334, %s25, 1
          %p336 = scmp.lt.s32.totalorder %s333, 1
          %s337 = scalar_select %p336, %s333, 1
          %s338 = smul.addr %s335, 2
          %s339 = sadd.s32 %s337, %s338
          %s340 = smul.addr %s339, 4
          %s341 = scalar_lea.vmem %s3, %s340
        $region56: #{tpu_custom_call.1} parent=51 // pred_fallthru
          _
      $region52: #{tpu_custom_call.1} parent=5 // pred_fallthru
        _
    $region6: #{tpu_custom_call.1} parent=1 // loop_footer
      %s18 = sadd.s32 1, %s14
    $region7: #{tpu_custom_call.1} parent=1 // loop_footer_branch
      %13 = sbr.rel target = $region3
    $region8: #{tpu_custom_call.1} parent=1 // loop_exit
      _
    %342 = vsyncpa [#allocation3], 1
    %s343 = scalar_lea.sflag [#allocation3], 1
    %344 = vsyncpa %s343, 1
    %345 = vsyncpa [#allocation4], 1
    %s346 = scalar_lea.sflag [#allocation4], 1
    %347 = vsyncpa %s346, 1
    %348 = vsyncpa [#allocation5], 1
    %s349 = scalar_lea.sflag [#allocation5], 1
    %350 = vsyncpa %s349, 1

</llo_original>
